<compile_context>
chip_gen: v5e
topology: v5e:2x2
jax: 0.10.0
libtpu: 0.0.40
codegen_flags: <defaults>
</compile_context>

<pallas_src>
import functools

import jax
import jax.numpy as jnp
from jax.experimental import pallas as pl
from jax.experimental.pallas import tpu as pltpu

# ---- static module hyper-parameters (Net defaults) ----
K_H, K_W = 2, 2
STRIDE_H, STRIDE_W = 1, 1
PAD_H, PAD_W = 0, 0
H, W = 5, 5
OUT_SIZE = 5
CNN_OUT_H = (H + 2 * PAD_H - (K_H - 1) - 1) // STRIDE_H + 1   # 4
CNN_OUT_W = (W + 2 * PAD_W - (K_W - 1) - 1) // STRIDE_W + 1   # 4
BN_EPS = 1e-5
HW = H * W                        # flattened spatial on the sublane axis
STATS_ROWS = 2 + 2 * CNN_OUT_H    # [sum, sumsq, max_h0..h3, min_h0..h3]

_LANE = 128


def _cdiv(a, b):
    return -(-a // b)


def _conv_rows(x_ref, cw_ref):
    """Bias-free 2x2 conv on a (HW, TB) tile -> CNN_OUT_H rows of (CNN_OUT_W, TB).

    Each tap is a static sublane slice of the flattened spatial axis and a
    scalar-broadcast FMA on the VPU (far too small for the MXU).
    """
    w = [[cw_ref[kh, kw] for kw in range(K_W)] for kh in range(K_H)]  # hoisted scalars
    rows = []
    for h in range(CNN_OUT_H):
        acc = None
        for kh in range(K_H):
            base = (h + kh) * W
            for kw in range(K_W):
                term = x_ref[base + kw:base + kw + CNN_OUT_W, :] * w[kh][kw]
                acc = term if acc is None else acc + term
        rows.append(acc)                             # (CNN_OUT_W, TB)
    return rows


def _row_stats(conv_rows):
    """Per-lane sum / sum-of-squares, and per-output-row max / min over conv-W."""
    s = sq = None
    mx, mn = [], []
    for c in conv_rows:
        cs = jnp.sum(c, axis=0, keepdims=True)        # (1, TB)
        cq = jnp.sum(c * c, axis=0, keepdims=True)    # (1, TB)
        s = cs if s is None else s + cs
        sq = cq if sq is None else sq + cq
        mx.append(jnp.max(c, axis=0, keepdims=True))  # (1, TB)
        mn.append(jnp.min(c, axis=0, keepdims=True))  # (1, TB)
    return s, sq, mx, mn


def _fc_rows(pooled, fcw_ref, fcb_ref):
    """Linear(CNN_OUT_H -> OUT_SIZE): 20 scalar-broadcast FMAs -> list of (1, TB)."""
    rows = []
    for o in range(OUT_SIZE):
        r = pooled[0] * fcw_ref[o, 0]
        for h in range(1, CNN_OUT_H):
            r = r + pooled[h] * fcw_ref[o, h]
        rows.append(r + fcb_ref[o])
    return rows


def _fused_kernel(x_ref, cw_ref, gamma_ref, beta_ref, fcw_ref, fcb_ref, o_ref, *, count):
    """Single-pass conv -> batch-BN -> ReLU -> maxpool -> FC on one resident tile.

    x_ref: (HW, B) VMEM (batch on lanes); cw/gamma/beta/fcw/fcb in SMEM;
    o_ref: (OUT_SIZE, B) lane-dense VMEM output, stored once.
    """
    s, sq, mx, mn = _row_stats(_conv_rows(x_ref, cw_ref))
    # Cross-lane totals (XLU reduce); kept (1,1) so the BN math stays on VPU/EUP.
    tot = jnp.sum(s, axis=1, keepdims=True)           # (1, 1)
    tot_sq = jnp.sum(sq, axis=1, keepdims=True)       # (1, 1)
    inv_n = 1.0 / count
    mean = tot * inv_n
    # E[x^2]-E[x]^2 in f32, clamped at 0 before rsqrt (review correctness note).
    var = jnp.maximum(tot_sq * inv_n - mean * mean, 0.0)
    scale = gamma_ref[0] * jax.lax.rsqrt(var + BN_EPS)          # (1, 1)
    shift = beta_ref[0] - mean * scale                          # (1, 1)
    # maxpool over conv-W of ReLU(scale*conv + shift):
    #   max_w ReLU(a*c + s) == ReLU(max(a*max_w c, a*min_w c) + s)  for any sign of a.
    pooled = [jnp.maximum(jnp.maximum(mx[h] * scale, mn[h] * scale) + shift, 0.0)
              for h in range(CNN_OUT_H)]                        # each (1, B)
    o_ref[...] = jnp.concatenate(_fc_rows(pooled, fcw_ref, fcb_ref), axis=0)


def _stats_kernel(x_ref, cw_ref, out_ref):
    """Batch-parallel pass 1: per-lane [sum, sumsq, max_w, min_w] of the bias-free conv.

    Zero-padded batch lanes contribute exactly 0 to sum/sumsq (true count is
    applied in the epilogue) and their max/min rows are sliced off afterwards.
    """
    s, sq, mx, mn = _row_stats(_conv_rows(x_ref, cw_ref))
    out_ref[...] = jnp.concatenate([s, sq] + mx + mn, axis=0)   # (STATS_ROWS, TB), one store


def net_forward_lanes(x_lanes, conv_w, conv_b, bn_gamma, bn_beta, fc_w, fc_b, *, tile=8192):
    """Forward from a pre-laid-out (H*W, B) float32 input (batch on TPU lanes).

    `tile` is the fused/multi-tile cutoff and the per-step lane count; sweep it
    per TPU generation (roughly 4-8K on v5e, 8-16K on v6e, 16-32K on v7x; lower
    it on v7x if you want >=2 parallel grid steps engaging both TensorCores).
    """
    assert x_lanes.shape[0] == HW
    B = x_lanes.shape[1]
    del conv_b  # conv bias cancels exactly under training-mode BatchNorm

    cw = conv_w.reshape(K_H, K_W).astype(jnp.float32)
    gamma = bn_gamma.reshape(1).astype(jnp.float32)
    beta = bn_beta.reshape(1).astype(jnp.float32)
    fcw = fc_w.reshape(OUT_SIZE, CNN_OUT_H).astype(jnp.float32)
    fcb = fc_b.reshape(OUT_SIZE).astype(jnp.float32)
    count = float(B) * float(CNN_OUT_H * CNN_OUT_W)

    smem = pl.BlockSpec(memory_space=pltpu.MemorySpace.SMEM)
    vmem_limit = 32 * 1024 * 1024                     # fits v5e/v6e/v7x scoped VMEM

    if B <= tile:
        # ---- fused single-pass path: block == full array, no padding, one launch ----
        out_t = pl.pallas_call(
            functools.partial(_fused_kernel, count=count),
            out_shape=jax.ShapeDtypeStruct((OUT_SIZE, B), jnp.float32),
            grid=(1,),
            in_specs=[pl.BlockSpec((HW, B), lambda i: (0, 0))] + [smem] * 5,
            out_specs=pl.BlockSpec((OUT_SIZE, B), lambda i: (0, 0)),
            compiler_params=pltpu.CompilerParams(
                dimension_semantics=("arbitrary",),
                vmem_limit_bytes=vmem_limit),
        )(x_lanes, cw, gamma, beta, fcw, fcb)
        return jnp.transpose(out_t)                   # (B, OUT_SIZE)

    # ---- multi-tile path: one batch-parallel stats pass + tiny XLA epilogue ----
    num_tiles = _cdiv(B, tile)                        # >= 2: shards across v7x's 2 TCs
    tb = _cdiv(_cdiv(B, num_tiles), _LANE) * _LANE    # per-step lanes, minimal 128-pad
    b_pad = num_tiles * tb
    x_p = x_lanes if b_pad == B else jnp.pad(x_lanes, ((0, 0), (0, b_pad - B)))

    stats = pl.pallas_call(
        _stats_kernel,
        out_shape=jax.ShapeDtypeStruct((STATS_ROWS, b_pad), jnp.float32),
        grid=(num_tiles,),
        in_specs=[pl.BlockSpec((HW, tb), lambda i: (0, i)), smem],
        out_specs=pl.BlockSpec((STATS_ROWS, tb), lambda i: (0, i)),
        compiler_params=pltpu.CompilerParams(
            dimension_semantics=("parallel",),
            vmem_limit_bytes=vmem_limit),
    )(x_p, cw)

    # Epilogue on ~40 B/sample of stats (never re-reads x); tiny, stays in XLA.
    sums = jnp.sum(stats[0:2, :], axis=1)             # padded lanes contribute 0
    mean = sums[0] / count
    var = jnp.maximum(sums[1] / count - mean * mean, 0.0)
    scale = gamma[0] * jax.lax.rsqrt(var + BN_EPS)
    shift = beta[0] - mean * scale
    mx = stats[2:2 + CNN_OUT_H, :B]                   # (CNN_OUT_H, B)
    mn = stats[2 + CNN_OUT_H:STATS_ROWS, :B]          # (CNN_OUT_H, B)
    act = jnp.maximum(jnp.maximum(mx * scale, mn * scale) + shift, 0.0)
    return jnp.transpose(fcw @ act + fcb[:, None])    # (B, OUT_SIZE)


def net_forward(x_nchw, conv_w, conv_b, bn_gamma, bn_beta, fc_w, fc_b, *, tile=8192):
    """Forward pass of Net from PyTorch-native (B, 1, H, W) input and parameters."""
    B = x_nchw.shape[0]
    # Relayout (B,1,H,W) -> (H*W, B): batch on lanes, flattened spatial on sublanes.
    # TODO(synk): callers that can produce x directly in (H*W, B) layout should use
    #             net_forward_lanes() and skip this extra HBM relayout pass.
    x_lanes = jnp.transpose(x_nchw.astype(jnp.float32).reshape(B, HW))
    return net_forward_lanes(x_lanes, conv_w, conv_b, bn_gamma, bn_beta, fc_w, fc_b,
                             tile=tile)


def net_forward_ref(x_nchw, conv_w, conv_b, bn_gamma, bn_beta, fc_w, fc_b):
    """Pure-JAX reference with the PyTorch module's forward semantics."""
    x = x_nchw.astype(jnp.float32)[:, 0]              # (B, H, W)
    w = conv_w.reshape(K_H, K_W).astype(jnp.float32)
    conv = jnp.zeros((x.shape[0], CNN_OUT_H, CNN_OUT_W), jnp.float32)
    for kh in range(K_H):
        for kw in range(K_W):
            conv = conv + x[:, kh:kh + CNN_OUT_H, kw:kw + CNN_OUT_W] * w[kh, kw]
    conv = conv + conv_b.reshape(())
    mean = jnp.mean(conv)
    var = jnp.mean((conv - mean) ** 2)                # biased variance (training BN)
    bn = (bn_gamma.reshape(()) * (conv - mean) / jnp.sqrt(var + BN_EPS)
          + bn_beta.reshape(()))
    act = jnp.maximum(bn, 0.0)
    pooled = jnp.max(act, axis=-1)                    # (B, CNN_OUT_H)
    return pooled @ fc_w.reshape(OUT_SIZE, CNN_OUT_H).astype(jnp.float32).T \
        + fc_b.reshape(OUT_SIZE).astype(jnp.float32)


if __name__ == "__main__":
    key = jax.random.PRNGKey(0)
    kx1, kx2, kcw, kcb, kg, kbb, kfw, kfb = jax.random.split(key, 8)

    # deterministic synthetic parameters (PyTorch-native shapes)
    conv_w = jax.random.normal(kcw, (1, 1, K_H, K_W), jnp.float32) * 0.5
    conv_b = jax.random.normal(kcb, (1,), jnp.float32) * 0.1
    bn_gamma = 1.0 + 0.2 * jax.random.normal(kg, (1,), jnp.float32)
    bn_beta = 0.1 * jax.random.normal(kbb, (1,), jnp.float32)
    fc_w = jax.random.normal(kfw, (OUT_SIZE, CNN_OUT_H), jnp.float32) * 0.5
    fc_b = jax.random.normal(kfb, (OUT_SIZE,), jnp.float32) * 0.1
    params = (conv_w, conv_b, bn_gamma, bn_beta, fc_w, fc_b)
    params_neg = (conv_w, conv_b, -bn_gamma, bn_beta, fc_w, fc_b)  # exercises scale < 0

    # check 1: small batch -> fused single-pass kernel (no padding, one launch)
    x1 = jax.random.normal(kx1, (2, 1, H, W), jnp.float32)
    out1 = jax.block_until_ready(net_forward(x1, *params))
    ref1 = net_forward_ref(x1, *params)
    assert out1.shape == (2, OUT_SIZE)
    assert jnp.allclose(out1, ref1, atol=1e-4, rtol=1e-3), (out1, ref1)

    # check 1b: fused path with negative BN scale (min-over-W branch)
    out1n = jax.block_until_ready(net_forward(x1, *params_neg))
    ref1n = net_forward_ref(x1, *params_neg)
    assert jnp.allclose(out1n, ref1n, atol=1e-4, rtol=1e-3), (out1n, ref1n)

    # check 2: multi-tile path with ragged lane padding (B=200, tile=128 -> 2 parallel tiles)
    x2 = jax.random.normal(kx2, (200, 1, H, W), jnp.float32)
    out2 = jax.block_until_ready(net_forward(x2, *params, tile=128))
    ref2 = net_forward_ref(x2, *params)
    assert out2.shape == (200, OUT_SIZE)
    assert jnp.allclose(out2, ref2, atol=1e-4, rtol=1e-3)

    # check 2b: multi-tile path with negative BN scale
    out2n = jax.block_until_ready(net_forward(x2, *params_neg, tile=128))
    ref2n = net_forward_ref(x2, *params_neg)
    assert jnp.allclose(out2n, ref2n, atol=1e-4, rtol=1e-3)

    print("KERNEL_OK")
</pallas_src>

<mosaic_0001>
module attributes {stable_mosaic.version = 11 : i64} {
  func.func @_fused_kernel(%arg0: i32, %arg1: memref<25x2xf32, #tpu.memory_space<vmem>>, %arg2: memref<2x2xf32, #tpu.memory_space<smem>>, %arg3: memref<1xf32, #tpu.memory_space<smem>>, %arg4: memref<1xf32, #tpu.memory_space<smem>>, %arg5: memref<5x4xf32, #tpu.memory_space<smem>>, %arg6: memref<5xf32, #tpu.memory_space<smem>>, %arg7: memref<5x2xf32, #tpu.memory_space<vmem>>) attributes {dimension_semantics = [#tpu.dimension_semantics<arbitrary>], iteration_bounds = array<i64: 1>, scalar_prefetch = 0 : i64, scratch_operands = 0 : i64, tpu.core_type = #tpu.core_type<tc>, window_params = [{pipeline_mode = #tpu.pipeline_mode<synchronous>, transform_indices = @transform_0, window_bounds = array<i64: 25, 2>}, {transform_indices = @transform_1, window_bounds = array<i64: 2, 2>}, {transform_indices = @transform_2, window_bounds = array<i64: 1>}, {transform_indices = @transform_3, window_bounds = array<i64: 1>}, {transform_indices = @transform_4, window_bounds = array<i64: 5, 4>}, {transform_indices = @transform_5, window_bounds = array<i64: 5>}, {pipeline_mode = #tpu.pipeline_mode<synchronous>, transform_indices = @transform_6, window_bounds = array<i64: 5, 2>}]} {
    %c0 = arith.constant 0 : index
    %c0_0 = arith.constant 0 : index
    %0 = memref.load %arg2[%c0, %c0_0] : memref<2x2xf32, #tpu.memory_space<smem>>
    %c0_1 = arith.constant 0 : index
    %c1 = arith.constant 1 : index
    %1 = memref.load %arg2[%c0_1, %c1] : memref<2x2xf32, #tpu.memory_space<smem>>
    %c1_2 = arith.constant 1 : index
    %c0_3 = arith.constant 0 : index
    %2 = memref.load %arg2[%c1_2, %c0_3] : memref<2x2xf32, #tpu.memory_space<smem>>
    %c1_4 = arith.constant 1 : index
    %c1_5 = arith.constant 1 : index
    %3 = memref.load %arg2[%c1_4, %c1_5] : memref<2x2xf32, #tpu.memory_space<smem>>
    %c0_6 = arith.constant 0 : index
    %c0_7 = arith.constant 0 : index
    %4 = vector.load %arg1[%c0_6, %c0_7] : memref<25x2xf32, #tpu.memory_space<vmem>>, vector<4x2xf32>
    %5 = vector.broadcast %0 : f32 to vector<4x2xf32>
    %6 = arith.mulf %4, %5 : vector<4x2xf32>
    %c1_8 = arith.constant 1 : index
    %c0_9 = arith.constant 0 : index
    %7 = vector.load %arg1[%c1_8, %c0_9] : memref<25x2xf32, #tpu.memory_space<vmem>>, vector<4x2xf32>
    %8 = vector.broadcast %1 : f32 to vector<4x2xf32>
    %9 = arith.mulf %7, %8 : vector<4x2xf32>
    %10 = arith.addf %6, %9 : vector<4x2xf32>
    %c5 = arith.constant 5 : index
    %c0_10 = arith.constant 0 : index
    %11 = vector.load %arg1[%c5, %c0_10] : memref<25x2xf32, #tpu.memory_space<vmem>>, vector<4x2xf32>
    %12 = vector.broadcast %2 : f32 to vector<4x2xf32>
    %13 = arith.mulf %11, %12 : vector<4x2xf32>
    %14 = arith.addf %10, %13 : vector<4x2xf32>
    %c6 = arith.constant 6 : index
    %c0_11 = arith.constant 0 : index
    %15 = vector.load %arg1[%c6, %c0_11] : memref<25x2xf32, #tpu.memory_space<vmem>>, vector<4x2xf32>
    %16 = vector.broadcast %3 : f32 to vector<4x2xf32>
    %17 = arith.mulf %15, %16 : vector<4x2xf32>
    %18 = arith.addf %14, %17 : vector<4x2xf32>
    %c5_12 = arith.constant 5 : index
    %c0_13 = arith.constant 0 : index
    %19 = vector.load %arg1[%c5_12, %c0_13] : memref<25x2xf32, #tpu.memory_space<vmem>>, vector<4x2xf32>
    %20 = vector.broadcast %0 : f32 to vector<4x2xf32>
    %21 = arith.mulf %19, %20 : vector<4x2xf32>
    %c6_14 = arith.constant 6 : index
    %c0_15 = arith.constant 0 : index
    %22 = vector.load %arg1[%c6_14, %c0_15] : memref<25x2xf32, #tpu.memory_space<vmem>>, vector<4x2xf32>
    %23 = vector.broadcast %1 : f32 to vector<4x2xf32>
    %24 = arith.mulf %22, %23 : vector<4x2xf32>
    %25 = arith.addf %21, %24 : vector<4x2xf32>
    %c10 = arith.constant 10 : index
    %c0_16 = arith.constant 0 : index
    %26 = vector.load %arg1[%c10, %c0_16] : memref<25x2xf32, #tpu.memory_space<vmem>>, vector<4x2xf32>
    %27 = vector.broadcast %2 : f32 to vector<4x2xf32>
    %28 = arith.mulf %26, %27 : vector<4x2xf32>
    %29 = arith.addf %25, %28 : vector<4x2xf32>
    %c11 = arith.constant 11 : index
    %c0_17 = arith.constant 0 : index
    %30 = vector.load %arg1[%c11, %c0_17] : memref<25x2xf32, #tpu.memory_space<vmem>>, vector<4x2xf32>
    %31 = vector.broadcast %3 : f32 to vector<4x2xf32>
    %32 = arith.mulf %30, %31 : vector<4x2xf32>
    %33 = arith.addf %29, %32 : vector<4x2xf32>
    %c10_18 = arith.constant 10 : index
    %c0_19 = arith.constant 0 : index
    %34 = vector.load %arg1[%c10_18, %c0_19] : memref<25x2xf32, #tpu.memory_space<vmem>>, vector<4x2xf32>
    %35 = vector.broadcast %0 : f32 to vector<4x2xf32>
    %36 = arith.mulf %34, %35 : vector<4x2xf32>
    %c11_20 = arith.constant 11 : index
    %c0_21 = arith.constant 0 : index
    %37 = vector.load %arg1[%c11_20, %c0_21] : memref<25x2xf32, #tpu.memory_space<vmem>>, vector<4x2xf32>
    %38 = vector.broadcast %1 : f32 to vector<4x2xf32>
    %39 = arith.mulf %37, %38 : vector<4x2xf32>
    %40 = arith.addf %36, %39 : vector<4x2xf32>
    %c15 = arith.constant 15 : index
    %c0_22 = arith.constant 0 : index
    %41 = vector.load %arg1[%c15, %c0_22] : memref<25x2xf32, #tpu.memory_space<vmem>>, vector<4x2xf32>
    %42 = vector.broadcast %2 : f32 to vector<4x2xf32>
    %43 = arith.mulf %41, %42 : vector<4x2xf32>
    %44 = arith.addf %40, %43 : vector<4x2xf32>
    %c16 = arith.constant 16 : index
    %c0_23 = arith.constant 0 : index
    %45 = vector.load %arg1[%c16, %c0_23] : memref<25x2xf32, #tpu.memory_space<vmem>>, vector<4x2xf32>
    %46 = vector.broadcast %3 : f32 to vector<4x2xf32>
    %47 = arith.mulf %45, %46 : vector<4x2xf32>
    %48 = arith.addf %44, %47 : vector<4x2xf32>
    %c15_24 = arith.constant 15 : index
    %c0_25 = arith.constant 0 : index
    %49 = vector.load %arg1[%c15_24, %c0_25] : memref<25x2xf32, #tpu.memory_space<vmem>>, vector<4x2xf32>
    %50 = vector.broadcast %0 : f32 to vector<4x2xf32>
    %51 = arith.mulf %49, %50 : vector<4x2xf32>
    %c16_26 = arith.constant 16 : index
    %c0_27 = arith.constant 0 : index
    %52 = vector.load %arg1[%c16_26, %c0_27] : memref<25x2xf32, #tpu.memory_space<vmem>>, vector<4x2xf32>
    %53 = vector.broadcast %1 : f32 to vector<4x2xf32>
    %54 = arith.mulf %52, %53 : vector<4x2xf32>
    %55 = arith.addf %51, %54 : vector<4x2xf32>
    %c20 = arith.constant 20 : index
    %c0_28 = arith.constant 0 : index
    %56 = vector.load %arg1[%c20, %c0_28] : memref<25x2xf32, #tpu.memory_space<vmem>>, vector<4x2xf32>
    %57 = vector.broadcast %2 : f32 to vector<4x2xf32>
    %58 = arith.mulf %56, %57 : vector<4x2xf32>
    %59 = arith.addf %55, %58 : vector<4x2xf32>
    %c21 = arith.constant 21 : index
    %c0_29 = arith.constant 0 : index
    %60 = vector.load %arg1[%c21, %c0_29] : memref<25x2xf32, #tpu.memory_space<vmem>>, vector<4x2xf32>
    %61 = vector.broadcast %3 : f32 to vector<4x2xf32>
    %62 = arith.mulf %60, %61 : vector<4x2xf32>
    %63 = arith.addf %59, %62 : vector<4x2xf32>
    %cst = arith.constant dense<0.000000e+00> : vector<2xf32>
    %64 = vector.multi_reduction <add>, %18, %cst [0] : vector<4x2xf32> to vector<2xf32>
    %65 = vector.shape_cast %64 : vector<2xf32> to vector<1x2xf32>
    %66 = arith.mulf %18, %18 : vector<4x2xf32>
    %cst_30 = arith.constant dense<0.000000e+00> : vector<2xf32>
    %67 = vector.multi_reduction <add>, %66, %cst_30 [0] : vector<4x2xf32> to vector<2xf32>
    %68 = vector.shape_cast %67 : vector<2xf32> to vector<1x2xf32>
    %cst_31 = arith.constant dense<0xFF800000> : vector<2xf32>
    %69 = vector.multi_reduction <maximumf>, %18, %cst_31 [0] : vector<4x2xf32> to vector<2xf32>
    %70 = vector.shape_cast %69 : vector<2xf32> to vector<1x2xf32>
    %cst_32 = arith.constant dense<0x7F800000> : vector<2xf32>
    %71 = vector.multi_reduction <minimumf>, %18, %cst_32 [0] : vector<4x2xf32> to vector<2xf32>
    %72 = vector.shape_cast %71 : vector<2xf32> to vector<1x2xf32>
    %cst_33 = arith.constant dense<0.000000e+00> : vector<2xf32>
    %73 = vector.multi_reduction <add>, %33, %cst_33 [0] : vector<4x2xf32> to vector<2xf32>
    %74 = vector.shape_cast %73 : vector<2xf32> to vector<1x2xf32>
    %75 = arith.mulf %33, %33 : vector<4x2xf32>
    %cst_34 = arith.constant dense<0.000000e+00> : vector<2xf32>
    %76 = vector.multi_reduction <add>, %75, %cst_34 [0] : vector<4x2xf32> to vector<2xf32>
    %77 = vector.shape_cast %76 : vector<2xf32> to vector<1x2xf32>
    %78 = arith.addf %65, %74 : vector<1x2xf32>
    %79 = arith.addf %68, %77 : vector<1x2xf32>
    %cst_35 = arith.constant dense<0xFF800000> : vector<2xf32>
    %80 = vector.multi_reduction <maximumf>, %33, %cst_35 [0] : vector<4x2xf32> to vector<2xf32>
    %81 = vector.shape_cast %80 : vector<2xf32> to vector<1x2xf32>
    %cst_36 = arith.constant dense<0x7F800000> : vector<2xf32>
    %82 = vector.multi_reduction <minimumf>, %33, %cst_36 [0] : vector<4x2xf32> to vector<2xf32>
    %83 = vector.shape_cast %82 : vector<2xf32> to vector<1x2xf32>
    %cst_37 = arith.constant dense<0.000000e+00> : vector<2xf32>
    %84 = vector.multi_reduction <add>, %48, %cst_37 [0] : vector<4x2xf32> to vector<2xf32>
    %85 = vector.shape_cast %84 : vector<2xf32> to vector<1x2xf32>
    %86 = arith.mulf %48, %48 : vector<4x2xf32>
    %cst_38 = arith.constant dense<0.000000e+00> : vector<2xf32>
    %87 = vector.multi_reduction <add>, %86, %cst_38 [0] : vector<4x2xf32> to vector<2xf32>
    %88 = vector.shape_cast %87 : vector<2xf32> to vector<1x2xf32>
    %89 = arith.addf %78, %85 : vector<1x2xf32>
    %90 = arith.addf %79, %88 : vector<1x2xf32>
    %cst_39 = arith.constant dense<0xFF800000> : vector<2xf32>
    %91 = vector.multi_reduction <maximumf>, %48, %cst_39 [0] : vector<4x2xf32> to vector<2xf32>
    %92 = vector.shape_cast %91 : vector<2xf32> to vector<1x2xf32>
    %cst_40 = arith.constant dense<0x7F800000> : vector<2xf32>
    %93 = vector.multi_reduction <minimumf>, %48, %cst_40 [0] : vector<4x2xf32> to vector<2xf32>
    %94 = vector.shape_cast %93 : vector<2xf32> to vector<1x2xf32>
    %cst_41 = arith.constant dense<0.000000e+00> : vector<2xf32>
    %95 = vector.multi_reduction <add>, %63, %cst_41 [0] : vector<4x2xf32> to vector<2xf32>
    %96 = vector.shape_cast %95 : vector<2xf32> to vector<1x2xf32>
    %97 = arith.mulf %63, %63 : vector<4x2xf32>
    %cst_42 = arith.constant dense<0.000000e+00> : vector<2xf32>
    %98 = vector.multi_reduction <add>, %97, %cst_42 [0] : vector<4x2xf32> to vector<2xf32>
    %99 = vector.shape_cast %98 : vector<2xf32> to vector<1x2xf32>
    %100 = arith.addf %89, %96 : vector<1x2xf32>
    %101 = arith.addf %90, %99 : vector<1x2xf32>
    %cst_43 = arith.constant dense<0xFF800000> : vector<2xf32>
    %102 = vector.multi_reduction <maximumf>, %63, %cst_43 [0] : vector<4x2xf32> to vector<2xf32>
    %103 = vector.shape_cast %102 : vector<2xf32> to vector<1x2xf32>
    %cst_44 = arith.constant dense<0x7F800000> : vector<2xf32>
    %104 = vector.multi_reduction <minimumf>, %63, %cst_44 [0] : vector<4x2xf32> to vector<2xf32>
    %105 = vector.shape_cast %104 : vector<2xf32> to vector<1x2xf32>
    %cst_45 = arith.constant dense<0.000000e+00> : vector<1xf32>
    %106 = vector.multi_reduction <add>, %100, %cst_45 [1] : vector<1x2xf32> to vector<1xf32>
    %107 = vector.shape_cast %106 : vector<1xf32> to vector<1x1xf32>
    %cst_46 = arith.constant dense<0.000000e+00> : vector<1xf32>
    %108 = vector.multi_reduction <add>, %101, %cst_46 [1] : vector<1x2xf32> to vector<1xf32>
    %109 = vector.shape_cast %108 : vector<1xf32> to vector<1x1xf32>
    %cst_47 = arith.constant 3.125000e-02 : f32
    %110 = vector.broadcast %cst_47 : f32 to vector<1x1xf32>
    %111 = arith.mulf %107, %110 : vector<1x1xf32>
    %cst_48 = arith.constant 3.125000e-02 : f32
    %112 = vector.broadcast %cst_48 : f32 to vector<1x1xf32>
    %113 = arith.mulf %109, %112 : vector<1x1xf32>
    %114 = arith.mulf %111, %111 : vector<1x1xf32>
    %115 = arith.subf %113, %114 : vector<1x1xf32>
    %cst_49 = arith.constant 0.000000e+00 : f32
    %116 = vector.broadcast %cst_49 : f32 to vector<1x1xf32>
    %117 = arith.maximumf %115, %116 : vector<1x1xf32>
    %c0_50 = arith.constant 0 : index
    %118 = memref.load %arg3[%c0_50] : memref<1xf32, #tpu.memory_space<smem>>
    %cst_51 = arith.constant 9.99999974E-6 : f32
    %119 = vector.broadcast %cst_51 : f32 to vector<1x1xf32>
    %120 = arith.addf %117, %119 : vector<1x1xf32>
    %121 = math.rsqrt %120 : vector<1x1xf32>
    %122 = vector.broadcast %118 : f32 to vector<1x1xf32>
    %123 = arith.mulf %122, %121 : vector<1x1xf32>
    %c0_52 = arith.constant 0 : index
    %124 = memref.load %arg4[%c0_52] : memref<1xf32, #tpu.memory_space<smem>>
    %125 = arith.mulf %111, %123 : vector<1x1xf32>
    %126 = vector.broadcast %124 : f32 to vector<1x1xf32>
    %127 = arith.subf %126, %125 : vector<1x1xf32>
    %128 = vector.broadcast %123 : vector<1x1xf32> to vector<1x2xf32>
    %129 = arith.mulf %70, %128 : vector<1x2xf32>
    %130 = vector.broadcast %123 : vector<1x1xf32> to vector<1x2xf32>
    %131 = arith.mulf %72, %130 : vector<1x2xf32>
    %132 = arith.maximumf %129, %131 : vector<1x2xf32>
    %133 = vector.broadcast %127 : vector<1x1xf32> to vector<1x2xf32>
    %134 = arith.addf %132, %133 : vector<1x2xf32>
    %cst_53 = arith.constant 0.000000e+00 : f32
    %135 = vector.broadcast %cst_53 : f32 to vector<1x2xf32>
    %136 = arith.maximumf %134, %135 : vector<1x2xf32>
    %137 = vector.broadcast %123 : vector<1x1xf32> to vector<1x2xf32>
    %138 = arith.mulf %81, %137 : vector<1x2xf32>
    %139 = vector.broadcast %123 : vector<1x1xf32> to vector<1x2xf32>
    %140 = arith.mulf %83, %139 : vector<1x2xf32>
    %141 = arith.maximumf %138, %140 : vector<1x2xf32>
    %142 = vector.broadcast %127 : vector<1x1xf32> to vector<1x2xf32>
    %143 = arith.addf %141, %142 : vector<1x2xf32>
    %cst_54 = arith.constant 0.000000e+00 : f32
    %144 = vector.broadcast %cst_54 : f32 to vector<1x2xf32>
    %145 = arith.maximumf %143, %144 : vector<1x2xf32>
    %146 = vector.broadcast %123 : vector<1x1xf32> to vector<1x2xf32>
    %147 = arith.mulf %92, %146 : vector<1x2xf32>
    %148 = vector.broadcast %123 : vector<1x1xf32> to vector<1x2xf32>
    %149 = arith.mulf %94, %148 : vector<1x2xf32>
    %150 = arith.maximumf %147, %149 : vector<1x2xf32>
    %151 = vector.broadcast %127 : vector<1x1xf32> to vector<1x2xf32>
    %152 = arith.addf %150, %151 : vector<1x2xf32>
    %cst_55 = arith.constant 0.000000e+00 : f32
    %153 = vector.broadcast %cst_55 : f32 to vector<1x2xf32>
    %154 = arith.maximumf %152, %153 : vector<1x2xf32>
    %155 = vector.broadcast %123 : vector<1x1xf32> to vector<1x2xf32>
    %156 = arith.mulf %103, %155 : vector<1x2xf32>
    %157 = vector.broadcast %123 : vector<1x1xf32> to vector<1x2xf32>
    %158 = arith.mulf %105, %157 : vector<1x2xf32>
    %159 = arith.maximumf %156, %158 : vector<1x2xf32>
    %160 = vector.broadcast %127 : vector<1x1xf32> to vector<1x2xf32>
    %161 = arith.addf %159, %160 : vector<1x2xf32>
    %cst_56 = arith.constant 0.000000e+00 : f32
    %162 = vector.broadcast %cst_56 : f32 to vector<1x2xf32>
    %163 = arith.maximumf %161, %162 : vector<1x2xf32>
    %c0_57 = arith.constant 0 : index
    %c0_58 = arith.constant 0 : index
    %164 = memref.load %arg5[%c0_57, %c0_58] : memref<5x4xf32, #tpu.memory_space<smem>>
    %165 = vector.broadcast %164 : f32 to vector<1x2xf32>
    %166 = arith.mulf %136, %165 : vector<1x2xf32>
    %c0_59 = arith.constant 0 : index
    %c1_60 = arith.constant 1 : index
    %167 = memref.load %arg5[%c0_59, %c1_60] : memref<5x4xf32, #tpu.memory_space<smem>>
    %168 = vector.broadcast %167 : f32 to vector<1x2xf32>
    %169 = arith.mulf %145, %168 : vector<1x2xf32>
    %170 = arith.addf %166, %169 : vector<1x2xf32>
    %c0_61 = arith.constant 0 : index
    %c2 = arith.constant 2 : index
    %171 = memref.load %arg5[%c0_61, %c2] : memref<5x4xf32, #tpu.memory_space<smem>>
    %172 = vector.broadcast %171 : f32 to vector<1x2xf32>
    %173 = arith.mulf %154, %172 : vector<1x2xf32>
    %174 = arith.addf %170, %173 : vector<1x2xf32>
    %c0_62 = arith.constant 0 : index
    %c3 = arith.constant 3 : index
    %175 = memref.load %arg5[%c0_62, %c3] : memref<5x4xf32, #tpu.memory_space<smem>>
    %176 = vector.broadcast %175 : f32 to vector<1x2xf32>
    %177 = arith.mulf %163, %176 : vector<1x2xf32>
    %178 = arith.addf %174, %177 : vector<1x2xf32>
    %c0_63 = arith.constant 0 : index
    %179 = memref.load %arg6[%c0_63] : memref<5xf32, #tpu.memory_space<smem>>
    %180 = vector.broadcast %179 : f32 to vector<1x2xf32>
    %181 = arith.addf %178, %180 : vector<1x2xf32>
    %c1_64 = arith.constant 1 : index
    %c0_65 = arith.constant 0 : index
    %182 = memref.load %arg5[%c1_64, %c0_65] : memref<5x4xf32, #tpu.memory_space<smem>>
    %183 = vector.broadcast %182 : f32 to vector<1x2xf32>
    %184 = arith.mulf %136, %183 : vector<1x2xf32>
    %c1_66 = arith.constant 1 : index
    %c1_67 = arith.constant 1 : index
    %185 = memref.load %arg5[%c1_66, %c1_67] : memref<5x4xf32, #tpu.memory_space<smem>>
    %186 = vector.broadcast %185 : f32 to vector<1x2xf32>
    %187 = arith.mulf %145, %186 : vector<1x2xf32>
    %188 = arith.addf %184, %187 : vector<1x2xf32>
    %c1_68 = arith.constant 1 : index
    %c2_69 = arith.constant 2 : index
    %189 = memref.load %arg5[%c1_68, %c2_69] : memref<5x4xf32, #tpu.memory_space<smem>>
    %190 = vector.broadcast %189 : f32 to vector<1x2xf32>
    %191 = arith.mulf %154, %190 : vector<1x2xf32>
    %192 = arith.addf %188, %191 : vector<1x2xf32>
    %c1_70 = arith.constant 1 : index
    %c3_71 = arith.constant 3 : index
    %193 = memref.load %arg5[%c1_70, %c3_71] : memref<5x4xf32, #tpu.memory_space<smem>>
    %194 = vector.broadcast %193 : f32 to vector<1x2xf32>
    %195 = arith.mulf %163, %194 : vector<1x2xf32>
    %196 = arith.addf %192, %195 : vector<1x2xf32>
    %c1_72 = arith.constant 1 : index
    %197 = memref.load %arg6[%c1_72] : memref<5xf32, #tpu.memory_space<smem>>
    %198 = vector.broadcast %197 : f32 to vector<1x2xf32>
    %199 = arith.addf %196, %198 : vector<1x2xf32>
    %c2_73 = arith.constant 2 : index
    %c0_74 = arith.constant 0 : index
    %200 = memref.load %arg5[%c2_73, %c0_74] : memref<5x4xf32, #tpu.memory_space<smem>>
    %201 = vector.broadcast %200 : f32 to vector<1x2xf32>
    %202 = arith.mulf %136, %201 : vector<1x2xf32>
    %c2_75 = arith.constant 2 : index
    %c1_76 = arith.constant 1 : index
    %203 = memref.load %arg5[%c2_75, %c1_76] : memref<5x4xf32, #tpu.memory_space<smem>>
    %204 = vector.broadcast %203 : f32 to vector<1x2xf32>
    %205 = arith.mulf %145, %204 : vector<1x2xf32>
    %206 = arith.addf %202, %205 : vector<1x2xf32>
    %c2_77 = arith.constant 2 : index
    %c2_78 = arith.constant 2 : index
    %207 = memref.load %arg5[%c2_77, %c2_78] : memref<5x4xf32, #tpu.memory_space<smem>>
    %208 = vector.broadcast %207 : f32 to vector<1x2xf32>
    %209 = arith.mulf %154, %208 : vector<1x2xf32>
    %210 = arith.addf %206, %209 : vector<1x2xf32>
    %c2_79 = arith.constant 2 : index
    %c3_80 = arith.constant 3 : index
    %211 = memref.load %arg5[%c2_79, %c3_80] : memref<5x4xf32, #tpu.memory_space<smem>>
    %212 = vector.broadcast %211 : f32 to vector<1x2xf32>
    %213 = arith.mulf %163, %212 : vector<1x2xf32>
    %214 = arith.addf %210, %213 : vector<1x2xf32>
    %c2_81 = arith.constant 2 : index
    %215 = memref.load %arg6[%c2_81] : memref<5xf32, #tpu.memory_space<smem>>
    %216 = vector.broadcast %215 : f32 to vector<1x2xf32>
    %217 = arith.addf %214, %216 : vector<1x2xf32>
    %c3_82 = arith.constant 3 : index
    %c0_83 = arith.constant 0 : index
    %218 = memref.load %arg5[%c3_82, %c0_83] : memref<5x4xf32, #tpu.memory_space<smem>>
    %219 = vector.broadcast %218 : f32 to vector<1x2xf32>
    %220 = arith.mulf %136, %219 : vector<1x2xf32>
    %c3_84 = arith.constant 3 : index
    %c1_85 = arith.constant 1 : index
    %221 = memref.load %arg5[%c3_84, %c1_85] : memref<5x4xf32, #tpu.memory_space<smem>>
    %222 = vector.broadcast %221 : f32 to vector<1x2xf32>
    %223 = arith.mulf %145, %222 : vector<1x2xf32>
    %224 = arith.addf %220, %223 : vector<1x2xf32>
    %c3_86 = arith.constant 3 : index
    %c2_87 = arith.constant 2 : index
    %225 = memref.load %arg5[%c3_86, %c2_87] : memref<5x4xf32, #tpu.memory_space<smem>>
    %226 = vector.broadcast %225 : f32 to vector<1x2xf32>
    %227 = arith.mulf %154, %226 : vector<1x2xf32>
    %228 = arith.addf %224, %227 : vector<1x2xf32>
    %c3_88 = arith.constant 3 : index
    %c3_89 = arith.constant 3 : index
    %229 = memref.load %arg5[%c3_88, %c3_89] : memref<5x4xf32, #tpu.memory_space<smem>>
    %230 = vector.broadcast %229 : f32 to vector<1x2xf32>
    %231 = arith.mulf %163, %230 : vector<1x2xf32>
    %232 = arith.addf %228, %231 : vector<1x2xf32>
    %c3_90 = arith.constant 3 : index
    %233 = memref.load %arg6[%c3_90] : memref<5xf32, #tpu.memory_space<smem>>
    %234 = vector.broadcast %233 : f32 to vector<1x2xf32>
    %235 = arith.addf %232, %234 : vector<1x2xf32>
    %c4 = arith.constant 4 : index
    %c0_91 = arith.constant 0 : index
    %236 = memref.load %arg5[%c4, %c0_91] : memref<5x4xf32, #tpu.memory_space<smem>>
    %237 = vector.broadcast %236 : f32 to vector<1x2xf32>
    %238 = arith.mulf %136, %237 : vector<1x2xf32>
    %c4_92 = arith.constant 4 : index
    %c1_93 = arith.constant 1 : index
    %239 = memref.load %arg5[%c4_92, %c1_93] : memref<5x4xf32, #tpu.memory_space<smem>>
    %240 = vector.broadcast %239 : f32 to vector<1x2xf32>
    %241 = arith.mulf %145, %240 : vector<1x2xf32>
    %242 = arith.addf %238, %241 : vector<1x2xf32>
    %c4_94 = arith.constant 4 : index
    %c2_95 = arith.constant 2 : index
    %243 = memref.load %arg5[%c4_94, %c2_95] : memref<5x4xf32, #tpu.memory_space<smem>>
    %244 = vector.broadcast %243 : f32 to vector<1x2xf32>
    %245 = arith.mulf %154, %244 : vector<1x2xf32>
    %246 = arith.addf %242, %245 : vector<1x2xf32>
    %c4_96 = arith.constant 4 : index
    %c3_97 = arith.constant 3 : index
    %247 = memref.load %arg5[%c4_96, %c3_97] : memref<5x4xf32, #tpu.memory_space<smem>>
    %248 = vector.broadcast %247 : f32 to vector<1x2xf32>
    %249 = arith.mulf %163, %248 : vector<1x2xf32>
    %250 = arith.addf %246, %249 : vector<1x2xf32>
    %c4_98 = arith.constant 4 : index
    %251 = memref.load %arg6[%c4_98] : memref<5xf32, #tpu.memory_space<smem>>
    %252 = vector.broadcast %251 : f32 to vector<1x2xf32>
    %253 = arith.addf %250, %252 : vector<1x2xf32>
    %254 = tpu.concatenate %181, %199, %217, %235, %253 in 0 : vector<1x2xf32>, vector<1x2xf32>, vector<1x2xf32>, vector<1x2xf32>, vector<1x2xf32> -> vector<5x2xf32>
    %c0_99 = arith.constant 0 : index
    %c0_100 = arith.constant 0 : index
    %255 = vector.load %arg7[%c0_99, %c0_100] : memref<5x2xf32, #tpu.memory_space<vmem>>, vector<5x2xf32>
    tpu.vector_store %arg7[%c0_99, %c0_100], %254 {strides = array<i32>} : memref<5x2xf32, #tpu.memory_space<vmem>>, vector<5x2xf32>,
    return
  }
  func.func @transform_0(%arg0: i32) -> (i32, i32) {
    %c0_i32 = arith.constant 0 : i32
    %c0_i32_0 = arith.constant 0 : i32
    %c0_i32_1 = arith.constant 0 : i32
    return %c0_i32, %c0_i32_0 : i32, i32
  }
  func.func @transform_1(%arg0: i32) -> (i32, i32) {
    %c0_i32 = arith.constant 0 : i32
    %c0_i32_0 = arith.constant 0 : i32
    %c0_i32_1 = arith.constant 0 : i32
    return %c0_i32, %c0_i32_0 : i32, i32
  }
  func.func @transform_2(%arg0: i32) -> i32 {
    %c0_i32 = arith.constant 0 : i32
    %c0_i32_0 = arith.constant 0 : i32
    return %c0_i32 : i32
  }
  func.func @transform_3(%arg0: i32) -> i32 {
    %c0_i32 = arith.constant 0 : i32
    %c0_i32_0 = arith.constant 0 : i32
    return %c0_i32 : i32
  }
  func.func @transform_4(%arg0: i32) -> (i32, i32) {
    %c0_i32 = arith.constant 0 : i32
    %c0_i32_0 = arith.constant 0 : i32
    %c0_i32_1 = arith.constant 0 : i32
    return %c0_i32, %c0_i32_0 : i32, i32
  }
  func.func @transform_5(%arg0: i32) -> i32 {
    %c0_i32 = arith.constant 0 : i32
    %c0_i32_0 = arith.constant 0 : i32
    return %c0_i32 : i32
  }
  func.func @transform_6(%arg0: i32) -> (i32, i32) {
    %c0_i32 = arith.constant 0 : i32
    %c0_i32_0 = arith.constant 0 : i32
    %c0_i32_1 = arith.constant 0 : i32
    return %c0_i32, %c0_i32_0 : i32, i32
  }
}

</mosaic_0001>

<llo_original>
// kernel: tpu_custom_call.1
$region0: #{tpu_custom_call.1}
  #allocation0 [shape = 'u32[]', space=smem, size = 0x4, offset = 0x4, fixed_abs, tag = 'smem constant byte address 0x4 - core index']
  #allocation1 [shape = 'u32[72,128]{1,0:T(1,128)}', space=vmem, size = 0x9000, scoped, tag = 'internal scratch']
  #allocation2 [shape = 'f32[1]{0:T(128)S(6)}', space=smem, size = 0x200, scoped, tag = 'scoped memory for tpu_custom_call.1']
  #allocation3 [shape = 'f32[1]{0:T(128)S(6)}', space=smem, size = 0x200, scoped, tag = 'scoped memory for tpu_custom_call.1']
  %s0 = inlined_call_operand.vmem [shape: f32[25,2], index: 0, kind: input, shape index: {}]
  %s1 = inlined_call_operand.vmem [shape: f32[2,2], index: 1, kind: input, shape index: {}]
  %s2 = inlined_call_operand.<no memory space> [shape: f32[1], index: 2, kind: input, shape index: {}]
  %s3 = inlined_call_operand.<no memory space> [shape: f32[1], index: 3, kind: input, shape index: {}]
  %s4 = inlined_call_operand.vmem [shape: f32[5,4], index: 4, kind: input, shape index: {}]
  %s5 = inlined_call_operand.vmem [shape: f32[5], index: 5, kind: input, shape index: {}]
  %s6 = inlined_call_operand.vmem [shape: f32[5,2], index: 6, kind: output, shape index: {}]
  %s7 = sld [smem:[#allocation0]]
  $region46: #{tpu_custom_call.1} parent=0
    _
  %s9 = ssub.s32 1, %s7
  %s10 = scalar_select 0, %s9, %s7
  %11 = sst [smem:[#allocation2]] %s2
  %12 = sst [smem:[#allocation3]] %s3
  $region1: #{tpu_custom_call.1} parent=0
    #allocation4 [shape = 'u8[1024]{0}', space=smem, size = 0x400, scoped, tag = 'input window, operand 1, single buffered']
    #allocation5 [shape = 's32[1]{0}', space=sflag, size = 0x4, scoped, tag = 'scoped memory for tpu_custom_call.1']
    #allocation6 [shape = 'u8[4096]{0}', space=smem, size = 0x1000, scoped, tag = 'input window, operand 4, single buffered']
    #allocation7 [shape = 's32[1]{0}', space=sflag, size = 0x4, scoped, tag = 'scoped memory for tpu_custom_call.1']
    #allocation8 [shape = 'u8[512]{0}', space=smem, size = 0x200, scoped, tag = 'input window, operand 5, single buffered']
    %13 = vsyncpa [#allocation5], 0
    %14 = vsyncpa [#allocation7], 0
    // Predicated region
    $region2: #{tpu_custom_call.1} parent=1 // pred_check
      _
    $region3: #{tpu_custom_call.1} parent=1 // pred_check_branch
      %16 = sbr.rel (0) target = $region5
    $region4: #{tpu_custom_call.1} parent=1 // pred_region
      _
    $region5: #{tpu_custom_call.1} parent=1 // pred_fallthru
      _
    // Predicated region
    $region6: #{tpu_custom_call.1} parent=1 // pred_check
      _
    $region7: #{tpu_custom_call.1} parent=1 // pred_check_branch
      %18 = sbr.rel (0) target = $region9
    $region8: #{tpu_custom_call.1} parent=1 // pred_region
      %20 = vsyncadd [#allocation5], 0
      %s22 = sshll.u32 %s1, 4
      %s23 = int_to_ptr.vmem [resolvable:$true] %s22
      %25 = dma.vmem_to_smem %s23, 32, [#allocation4], [#allocation5]
    $region9: #{tpu_custom_call.1} parent=1 // pred_fallthru
      _
    // Predicated region
    $region10: #{tpu_custom_call.1} parent=1 // pred_check
      _
    $region11: #{tpu_custom_call.1} parent=1 // pred_check_branch
      %27 = sbr.rel (0) target = $region13
    $region12: #{tpu_custom_call.1} parent=1 // pred_region
      _
    $region13: #{tpu_custom_call.1} parent=1 // pred_fallthru
      _
    // Predicated region
    $region14: #{tpu_custom_call.1} parent=1 // pred_check
      _
    $region15: #{tpu_custom_call.1} parent=1 // pred_check_branch
      %29 = sbr.rel (0) target = $region17
    $region16: #{tpu_custom_call.1} parent=1 // pred_region
      _
    $region17: #{tpu_custom_call.1} parent=1 // pred_fallthru
      _
    // Predicated region
    $region18: #{tpu_custom_call.1} parent=1 // pred_check
      _
    $region19: #{tpu_custom_call.1} parent=1 // pred_check_branch
      %31 = sbr.rel (0) target = $region21
    $region20: #{tpu_custom_call.1} parent=1 // pred_region
      %33 = vsyncadd [#allocation7], 0
      %s35 = sshll.u32 %s4, 4
      %s36 = int_to_ptr.vmem [resolvable:$true] %s35
      %38 = dma.vmem_to_smem %s36, 128, [#allocation6], [#allocation7]
    $region21: #{tpu_custom_call.1} parent=1 // pred_fallthru
      _
    // Predicated region
    $region22: #{tpu_custom_call.1} parent=1 // pred_check
      _
    $region23: #{tpu_custom_call.1} parent=1 // pred_check_branch
      %40 = sbr.rel (0) target = $region25
    $region24: #{tpu_custom_call.1} parent=1 // pred_region
      %42 = vsyncadd [#allocation7], 0
      %s44 = sshll.u32 %s5, 4
      %s45 = int_to_ptr.vmem [resolvable:$true] %s44
      %47 = dma.vmem_to_smem %s45, 16, [#allocation8], [#allocation7]
    $region25: #{tpu_custom_call.1} parent=1 // pred_fallthru
      _
    // Predicated region
    $region26: #{tpu_custom_call.1} parent=1 // pred_check
      _
    $region27: #{tpu_custom_call.1} parent=1 // pred_check_branch
      %49 = sbr.rel (0) target = $region29
    $region28: #{tpu_custom_call.1} parent=1 // pred_region
      %51 = dma.done [#allocation5], 32
    $region29: #{tpu_custom_call.1} parent=1 // pred_fallthru
      _
    // Predicated region
    $region30: #{tpu_custom_call.1} parent=1 // pred_check
      _
    $region31: #{tpu_custom_call.1} parent=1 // pred_check_branch
      %53 = sbr.rel (0) target = $region33
    $region32: #{tpu_custom_call.1} parent=1 // pred_region
      %55 = dma.done [#allocation7], 128
    $region33: #{tpu_custom_call.1} parent=1 // pred_fallthru
      _
    // Predicated region
    $region34: #{tpu_custom_call.1} parent=1 // pred_check
      _
    $region35: #{tpu_custom_call.1} parent=1 // pred_check_branch
      %57 = sbr.rel (0) target = $region37
    $region36: #{tpu_custom_call.1} parent=1 // pred_region
      %59 = dma.done [#allocation7], 16
    $region37: #{tpu_custom_call.1} parent=1 // pred_fallthru
      _
    %60 = sfence
    %s61 = sld [smem:[#allocation4]]
    %s62 = sld [smem:[#allocation4 + $0x1]]
    %s63 = sld [smem:[#allocation4 + $0x80]]
    %s64 = sld [smem:[#allocation4 + $0x81]]
    %v65 = vld [vmem:[%s0] sm:$0xf]
    %v66 = vstv %s61
    %v67 = vmul.f32 %v65, %v66
    %v68 = vld [vmem:[%s0 + $0x1] sm:$0xf]
    %v69 = vstv %s62
    %v70 = vmul.f32 %v68, %v69
    %v71 = vadd.f32 %v67, %v70
    %v72 = vld [vmem:[%s0 + $0x5] sm:$0xf]
    %v73 = vstv %s63
    %v74 = vmul.f32 %v72, %v73
    %v75 = vadd.f32 %v71, %v74
    %v76 = vld [vmem:[%s0 + $0x6] sm:$0xf]
    %v77 = vstv %s64
    %v78 = vmul.f32 %v76, %v77
    %v79 = vadd.f32 %v75, %v78
    %v80 = vmul.f32 %v72, %v66
    %v81 = vmul.f32 %v76, %v69
    %v82 = vadd.f32 %v80, %v81
    %v83 = vld [vmem:[%s0 + $0xa] sm:$0xf]
    %v84 = vmul.f32 %v83, %v73
    %v85 = vadd.f32 %v82, %v84
    %v86 = vld [vmem:[%s0 + $0xb] sm:$0xf]
    %v87 = vmul.f32 %v86, %v77
    %v88 = vadd.f32 %v85, %v87
    %v89 = vmul.f32 %v83, %v66
    %v90 = vmul.f32 %v86, %v69
    %v91 = vadd.f32 %v89, %v90
    %v92 = vld [vmem:[%s0 + $0xf] sm:$0xf]
    %v93 = vmul.f32 %v92, %v73
    %v94 = vadd.f32 %v91, %v93
    %v95 = vld [vmem:[%s0 + $0x10] sm:$0xf]
    %v96 = vmul.f32 %v95, %v77
    %v97 = vadd.f32 %v94, %v96
    %v98 = vmul.f32 %v92, %v66
    %v99 = vmul.f32 %v95, %v69
    %v100 = vadd.f32 %v98, %v99
    %v101 = vld [vmem:[%s0 + $0x14] sm:$0xf]
    %v102 = vmul.f32 %v101, %v73
    %v103 = vadd.f32 %v100, %v102
    %v104 = vld [vmem:[%s0 + $0x15] sm:$0xf]
    %v105 = vmul.f32 %v104, %v77
    %v106 = vadd.f32 %v103, %v105
    %vm107 = vcmask 11264
    %v108 = vsel %vm107, %v79, 0.0
    %v109 = vrot.slane %v108, 4
    %v110 = vadd.f32 %v108, %v109
    %v111 = vrot.slane %v110, 2
    %v112 = vadd.f32 %v110, %v111
    %v113 = vrot.slane %v112, 1
    %v114 = vadd.f32 %v112, %v113
    %v115 = vmul.f32 %v79, %v79
    %v116 = vsel %vm107, %v115, 0.0
    %v117 = vrot.slane %v116, 4
    %v118 = vadd.f32 %v116, %v117
    %v119 = vrot.slane %v118, 2
    %v120 = vadd.f32 %v118, %v119
    %v121 = vrot.slane %v120, 1
    %v122 = vadd.f32 %v120, %v121
    %v123 = vsel %vm107, %v79, -inf
    %v124 = vrot.slane %v123, 4
    %v125 = vmax.f32 %v123, %v124
    %v126 = vrot.slane %v125, 2
    %v127 = vmax.f32 %v125, %v126
    %v128 = vrot.slane %v127, 1
    %v129 = vmax.f32 %v127, %v128
    %v130 = vsel %vm107, %v79, inf
    %v131 = vrot.slane %v130, 4
    %v132 = vmin.f32 %v130, %v131
    %v133 = vrot.slane %v132, 2
    %v134 = vmin.f32 %v132, %v133
    %v135 = vrot.slane %v134, 1
    %v136 = vmin.f32 %v134, %v135
    %v137 = vsel %vm107, %v88, 0.0
    %v138 = vrot.slane %v137, 4
    %v139 = vadd.f32 %v137, %v138
    %v140 = vrot.slane %v139, 2
    %v141 = vadd.f32 %v139, %v140
    %v142 = vrot.slane %v141, 1
    %v143 = vadd.f32 %v141, %v142
    %v144 = vmul.f32 %v88, %v88
    %v145 = vsel %vm107, %v144, 0.0
    %v146 = vrot.slane %v145, 4
    %v147 = vadd.f32 %v145, %v146
    %v148 = vrot.slane %v147, 2
    %v149 = vadd.f32 %v147, %v148
    %v150 = vrot.slane %v149, 1
    %v151 = vadd.f32 %v149, %v150
    %v152 = vadd.f32 %v114, %v143
    %v153 = vadd.f32 %v122, %v151
    %v154 = vsel %vm107, %v88, -inf
    %v155 = vrot.slane %v154, 4
    %v156 = vmax.f32 %v154, %v155
    %v157 = vrot.slane %v156, 2
    %v158 = vmax.f32 %v156, %v157
    %v159 = vrot.slane %v158, 1
    %v160 = vmax.f32 %v158, %v159
    %v161 = vsel %vm107, %v88, inf
    %v162 = vrot.slane %v161, 4
    %v163 = vmin.f32 %v161, %v162
    %v164 = vrot.slane %v163, 2
    %v165 = vmin.f32 %v163, %v164
    %v166 = vrot.slane %v165, 1
    %v167 = vmin.f32 %v165, %v166
    %v168 = vsel %vm107, %v97, 0.0
    %v169 = vrot.slane %v168, 4
    %v170 = vadd.f32 %v168, %v169
    %v171 = vrot.slane %v170, 2
    %v172 = vadd.f32 %v170, %v171
    %v173 = vrot.slane %v172, 1
    %v174 = vadd.f32 %v172, %v173
    %v175 = vmul.f32 %v97, %v97
    %v176 = vsel %vm107, %v175, 0.0
    %v177 = vrot.slane %v176, 4
    %v178 = vadd.f32 %v176, %v177
    %v179 = vrot.slane %v178, 2
    %v180 = vadd.f32 %v178, %v179
    %v181 = vrot.slane %v180, 1
    %v182 = vadd.f32 %v180, %v181
    %v183 = vadd.f32 %v152, %v174
    %v184 = vadd.f32 %v153, %v182
    %v185 = vsel %vm107, %v97, -inf
    %v186 = vrot.slane %v185, 4
    %v187 = vmax.f32 %v185, %v186
    %v188 = vrot.slane %v187, 2
    %v189 = vmax.f32 %v187, %v188
    %v190 = vrot.slane %v189, 1
    %v191 = vmax.f32 %v189, %v190
    %v192 = vsel %vm107, %v97, inf
    %v193 = vrot.slane %v192, 4
    %v194 = vmin.f32 %v192, %v193
    %v195 = vrot.slane %v194, 2
    %v196 = vmin.f32 %v194, %v195
    %v197 = vrot.slane %v196, 1
    %v198 = vmin.f32 %v196, %v197
    %v199 = vsel %vm107, %v106, 0.0
    %v200 = vrot.slane %v199, 4
    %v201 = vadd.f32 %v199, %v200
    %v202 = vrot.slane %v201, 2
    %v203 = vadd.f32 %v201, %v202
    %v204 = vrot.slane %v203, 1
    %v205 = vadd.f32 %v203, %v204
    %v206 = vmul.f32 %v106, %v106
    %v207 = vsel %vm107, %v206, 0.0
    %v208 = vrot.slane %v207, 4
    %v209 = vadd.f32 %v207, %v208
    %v210 = vrot.slane %v209, 2
    %v211 = vadd.f32 %v209, %v210
    %v212 = vrot.slane %v211, 1
    %v213 = vadd.f32 %v211, %v212
    %v214 = vadd.f32 %v183, %v205
    %v215 = vadd.f32 %v184, %v213
    %v216 = vsel %vm107, %v106, -inf
    %v217 = vrot.slane %v216, 4
    %v218 = vmax.f32 %v216, %v217
    %v219 = vrot.slane %v218, 2
    %v220 = vmax.f32 %v218, %v219
    %v221 = vrot.slane %v220, 1
    %v222 = vmax.f32 %v220, %v221
    %v223 = vsel %vm107, %v106, inf
    %v224 = vrot.slane %v223, 4
    %v225 = vmin.f32 %v223, %v224
    %v226 = vrot.slane %v225, 2
    %v227 = vmin.f32 %v225, %v226
    %v228 = vrot.slane %v227, 1
    %v229 = vmin.f32 %v227, %v228
    %vm230 = vcmask 15360
    %v231 = vsel %vm230, %v214, 0.0
    %232 = vadd.xlane.f32.xlu0 %v231
    %v233 = vpop.xlane.xlu0 %232
    %v234 = vsel %vm230, %v215, 0.0
    %235 = vadd.xlane.f32.xlu0 %v234
    %v236 = vpop.xlane.xlu0 %235
    %v237 = vmul.f32 %v233, 0.03125
    %v238 = vmul.f32 %v236, 0.03125
    %v239 = vmul.f32 %v237, %v237
    %v240 = vsub.f32 %v238, %v239
    %v241 = vmax.f32 %v240, 0.0
    %s242 = sld [smem:[#allocation2]]
    %v243 = vadd.f32 %v241, 1e-05
    %v244 = vrsqrt.pop %v243
    %v245 = vmul.f32 %v244, %v243
    %v246 = vmul.f32 %v245, %v244
    %v247 = vmul.f32 0.5, %v246
    %v248 = vsub.f32 1.5, %v247
    %v249 = vmul.f32 %v244, %v248
    %vm250 = vweird.f32 %v243
    %vm251 = vweird.f32 %v244
    %vm252 = vmor %vm250, %vm251
    %v253 = vsel %vm252, %v244, %v249
    %v254 = vstv %s242
    %v255 = vmul.f32 %v254, %v253
    %s256 = sld [smem:[#allocation3]]
    %v257 = vmul.f32 %v237, %v255
    %v258 = vstv %s256
    %v259 = vsub.f32 %v258, %v257
    %v260 = vmul.f32 %v129, %v255
    %v261 = vmul.f32 %v136, %v255
    %v262 = vmax.f32 %v260, %v261
    %v263 = vadd.f32 %v262, %v259
    %v264 = vmax.f32 %v263, 0.0
    %v265 = vmul.f32 %v160, %v255
    %v266 = vmul.f32 %v167, %v255
    %v267 = vmax.f32 %v265, %v266
    %v268 = vadd.f32 %v267, %v259
    %v269 = vmax.f32 %v268, 0.0
    %v270 = vmul.f32 %v191, %v255
    %v271 = vmul.f32 %v198, %v255
    %v272 = vmax.f32 %v270, %v271
    %v273 = vadd.f32 %v272, %v259
    %v274 = vmax.f32 %v273, 0.0
    %v275 = vmul.f32 %v222, %v255
    %v276 = vmul.f32 %v229, %v255
    %v277 = vmax.f32 %v275, %v276
    %v278 = vadd.f32 %v277, %v259
    %v279 = vmax.f32 %v278, 0.0
    %s280 = sld [smem:[#allocation6]]
    %v281 = vstv %s280
    %v282 = vmul.f32 %v264, %v281
    %s283 = sld [smem:[#allocation6 + $0x1]]
    %v284 = vstv %s283
    %v285 = vmul.f32 %v269, %v284
    %v286 = vadd.f32 %v282, %v285
    %s287 = sld [smem:[#allocation6 + $0x2]]
    %v288 = vstv %s287
    %v289 = vmul.f32 %v274, %v288
    %v290 = vadd.f32 %v286, %v289
    %s291 = sld [smem:[#allocation6 + $0x3]]
    %v292 = vstv %s291
    %v293 = vmul.f32 %v279, %v292
    %v294 = vadd.f32 %v290, %v293
    %s295 = sld [smem:[#allocation8]]
    %v296 = vstv %s295
    %v297 = vadd.f32 %v294, %v296
    %s298 = sld [smem:[#allocation6 + $0x80]]
    %v299 = vstv %s298
    %v300 = vmul.f32 %v264, %v299
    %s301 = sld [smem:[#allocation6 + $0x81]]
    %v302 = vstv %s301
    %v303 = vmul.f32 %v269, %v302
    %v304 = vadd.f32 %v300, %v303
    %s305 = sld [smem:[#allocation6 + $0x82]]
    %v306 = vstv %s305
    %v307 = vmul.f32 %v274, %v306
    %v308 = vadd.f32 %v304, %v307
    %s309 = sld [smem:[#allocation6 + $0x83]]
    %v310 = vstv %s309
    %v311 = vmul.f32 %v279, %v310
    %v312 = vadd.f32 %v308, %v311
    %s313 = sld [smem:[#allocation8 + $0x1]]
    %v314 = vstv %s313
    %v315 = vadd.f32 %v312, %v314
    %s316 = sld [smem:[#allocation6 + $0x100]]
    %v317 = vstv %s316
    %v318 = vmul.f32 %v264, %v317
    %s319 = sld [smem:[#allocation6 + $0x101]]
    %v320 = vstv %s319
    %v321 = vmul.f32 %v269, %v320
    %v322 = vadd.f32 %v318, %v321
    %s323 = sld [smem:[#allocation6 + $0x102]]
    %v324 = vstv %s323
    %v325 = vmul.f32 %v274, %v324
    %v326 = vadd.f32 %v322, %v325
    %s327 = sld [smem:[#allocation6 + $0x103]]
    %v328 = vstv %s327
    %v329 = vmul.f32 %v279, %v328
    %v330 = vadd.f32 %v326, %v329
    %s331 = sld [smem:[#allocation8 + $0x2]]
    %v332 = vstv %s331
    %v333 = vadd.f32 %v330, %v332
    %s334 = sld [smem:[#allocation6 + $0x180]]
    %v335 = vstv %s334
    %v336 = vmul.f32 %v264, %v335
    %s337 = sld [smem:[#allocation6 + $0x181]]
    %v338 = vstv %s337
    %v339 = vmul.f32 %v269, %v338
    %v340 = vadd.f32 %v336, %v339
    %s341 = sld [smem:[#allocation6 + $0x182]]
    %v342 = vstv %s341
    %v343 = vmul.f32 %v274, %v342
    %v344 = vadd.f32 %v340, %v343
    %s345 = sld [smem:[#allocation6 + $0x183]]
    %v346 = vstv %s345
    %v347 = vmul.f32 %v279, %v346
    %v348 = vadd.f32 %v344, %v347
    %s349 = sld [smem:[#allocation8 + $0x3]]
    %v350 = vstv %s349
    %v351 = vadd.f32 %v348, %v350
    %s352 = sld [smem:[#allocation6 + $0x200]]
    %v353 = vstv %s352
    %v354 = vmul.f32 %v264, %v353
    %s355 = sld [smem:[#allocation6 + $0x201]]
    %v356 = vstv %s355
    %v357 = vmul.f32 %v269, %v356
    %v358 = vadd.f32 %v354, %v357
    %s359 = sld [smem:[#allocation6 + $0x202]]
    %v360 = vstv %s359
    %v361 = vmul.f32 %v274, %v360
    %v362 = vadd.f32 %v358, %v361
    %s363 = sld [smem:[#allocation6 + $0x203]]
    %v364 = vstv %s363
    %v365 = vmul.f32 %v279, %v364
    %v366 = vadd.f32 %v362, %v365
    %s367 = sld [smem:[#allocation8 + $0x4]]
    %v368 = vstv %s367
    %v369 = vadd.f32 %v366, %v368
    %vm370 = vcmask 1040384
    %v371 = vsel %vm370, %v297, %v315
    %vm372 = vcmask 1041408
    %v373 = vsel %vm372, %v371, %v333
    %vm374 = vcmask 1042432
    %v375 = vsel %vm374, %v373, %v351
    %vm376 = vcmask 1043456
    %v377 = vsel %vm376, %v375, %v369
    %vm378 = vcmask 12288
    %379 = vst.msk [vmem:[%s6] sm:$0x1f] %vm378, %v377
    // Predicated region
    $region38: #{tpu_custom_call.1} parent=1 // pred_check
      _
    $region39: #{tpu_custom_call.1} parent=1 // pred_check_branch
      %381 = sbr.rel (0) target = $region41
    $region40: #{tpu_custom_call.1} parent=1 // pred_region
      _
    $region41: #{tpu_custom_call.1} parent=1 // pred_fallthru
      _
    // Predicated region
    $region42: #{tpu_custom_call.1} parent=1 // pred_check
      _
    $region43: #{tpu_custom_call.1} parent=1 // pred_check_branch
      %383 = sbr.rel (0) target = $region45
    $region44: #{tpu_custom_call.1} parent=1 // pred_region
      _
    $region45: #{tpu_custom_call.1} parent=1 // pred_fallthru
      _
    %384 = vsyncpa [#allocation5], 1
    %385 = vsyncpa [#allocation7], 1

</llo_original>
